<compile_context>
chip_gen: v7x
topology: tpu7x:2x2x1
jax: 0.10.0
libtpu: 0.0.40
codegen_flags: <defaults>
</compile_context>

<pallas_src>
import jax
import jax.numpy as jnp
from jax.experimental import pallas as pl
from jax.experimental.pallas import tpu as pltpu

NUM_FEATURES = 32          # `n` in the source module is unspecified; pick 32
H1, H2, OUT = 32, 16, 3
PACK = 4                   # samples per 128-lane row (4 * 32 = 128)
MAX_TILE_R = 4096          # packed rows per grid step (=> 16K samples)
MIN_GRID_STEPS = 8         # keep the grid deep enough for v7x's 2 TensorCores


def _round_up(x, m):
    return ((x + m - 1) // m) * m


def phasediff_mlp_kernel(x_ref, w0_ref, b0_ref, w1_ref, b1_ref, w2_ref, b2_ref,
                         o_ref):
    # One packed batch tile per grid step; weights/biases are VMEM-resident
    # (constant index_maps).  All matmul inputs are bf16, accumulation f32.
    x = x_ref[...].astype(jnp.bfloat16)                         # [tr, 128]

    # fc (4x block-diagonal): [tr,128] @ [128,128] + [1,128]
    h = jnp.dot(x, w0_ref[...], preferred_element_type=jnp.float32) + b0_ref[...]
    h = jnp.maximum(h, 0.0)                                     # ReLU
    # TODO(synk): Dropout(p=0.5) is identity in eval mode; training-mode masking
    # (pltpu.prng_random_bits) intentionally not applied.

    # fc1 (4x block-diagonal): [tr,128] @ [128,64] + [1,64]
    h = jnp.dot(h.astype(jnp.bfloat16), w1_ref[...],
                preferred_element_type=jnp.float32) + b1_ref[...]
    h = jnp.maximum(h, 0.0)                                     # ReLU

    # fc2 (4x block-diagonal): [tr,64] @ [64,12] + [1,12]
    o_ref[...] = jnp.dot(h.astype(jnp.bfloat16), w2_ref[...],
                         preferred_element_type=jnp.float32) + b2_ref[...]


def pack_params(params):
    """4x block-diagonal bf16 weights and 4x-tiled f32 biases (tiny, done once)."""
    w0, b0, w1, b1, w2, b2 = params
    eye = jnp.eye(PACK, dtype=jnp.float32)

    def bd(w):
        return jnp.kron(eye, w).astype(jnp.bfloat16)

    def tb(b):
        return jnp.tile(b.reshape(1, -1), (1, PACK)).astype(jnp.float32)

    return (bd(w0), tb(b0), bd(w1), tb(b1), bd(w2), tb(b2))


def phasediff_forward(x, params, *, max_tile_r=MAX_TILE_R):
    B, F = x.shape
    assert F == NUM_FEATURES
    w0p, b0p, w1p, b1p, w2p, b2p = pack_params(params)

    # Pack 4 samples per 128-lane row.  Only B % 4 != 0 needs a (<=3 row) pad;
    # there is NO padding to the batch-tile size.
    rem = (-B) % PACK
    if rem:
        x = jnp.concatenate([x, jnp.zeros((rem, F), x.dtype)], axis=0)
    xp = x.reshape(-1, PACK * F)                # [R, 128], free contiguous reshape
    R = xp.shape[0]                             # valid packed rows
    if R < 8:                                   # tiny-batch only: one full sublane tile
        xp = jnp.concatenate([xp, jnp.zeros((8 - R, PACK * F), xp.dtype)], axis=0)
    R_in = xp.shape[0]

    # Packed-row tile: multiple of 8 sublanes, capped at max_tile_r, and small
    # enough that the grid keeps >= MIN_GRID_STEPS steps for megacore sharding.
    tile_r = max(8, min(max_tile_r, _round_up(pl.cdiv(R_in, MIN_GRID_STEPS), 8)))
    num_blocks = pl.cdiv(R_in, tile_r)
    out_rows = num_blocks * tile_r              # over-allocate: output stores stay in-bounds

    def resident(a):
        # Whole-array block, constant index_map -> stays in VMEM across steps.
        return pl.BlockSpec(a.shape, lambda i: (0,) * a.ndim)

    samples = R_in * PACK
    flops = 2 * samples * (F * H1 + H1 * H2 + H2 * OUT)
    w_bytes = sum(int(a.size) * a.dtype.itemsize
                  for a in (w0p, b0p, w1p, b1p, w2p, b2p))
    bytes_accessed = (int(xp.size) * xp.dtype.itemsize
                      + out_rows * PACK * OUT * 4 + w_bytes)
    cost = pl.CostEstimate(flops=flops, transcendentals=0,
                           bytes_accessed=bytes_accessed)

    out = pl.pallas_call(
        phasediff_mlp_kernel,
        out_shape=jax.ShapeDtypeStruct((out_rows, PACK * OUT), jnp.float32),
        grid=(num_blocks,),
        in_specs=[
            pl.BlockSpec((tile_r, PACK * F), lambda i: (i, 0)),
            resident(w0p), resident(b0p),
            resident(w1p), resident(b1p),
            resident(w2p), resident(b2p),
        ],
        out_specs=pl.BlockSpec((tile_r, PACK * OUT), lambda i: (i, 0)),
        compiler_params=pltpu.CompilerParams(
            dimension_semantics=("parallel",),
            vmem_limit_bytes=32 * 1024 * 1024),
        cost_estimate=cost,
    )(xp, w0p, b0p, w1p, b1p, w2p, b2p)

    # [num_blocks*tile_r, 12] -> valid packed rows -> [B, 3]
    return out[:R].reshape(R * PACK, OUT)[:B]


def init_params(key):
    # Deterministic, PyTorch-Linear-style uniform(-1/sqrt(fan_in), 1/sqrt(fan_in)).
    def linear(key, fan_in, fan_out):
        kw, kb = jax.random.split(key)
        bound = 1.0 / jnp.sqrt(fan_in)
        w = jax.random.uniform(kw, (fan_in, fan_out), jnp.float32, -bound, bound)
        b = jax.random.uniform(kb, (1, fan_out), jnp.float32, -bound, bound)
        return w, b

    k0, k1, k2 = jax.random.split(key, 3)
    w0, b0 = linear(k0, NUM_FEATURES, H1)
    w1, b1 = linear(k1, H1, H2)
    w2, b2 = linear(k2, H2, OUT)
    return (w0, b0, w1, b1, w2, b2)


def reference_forward(x, params):
    # Pure-JAX reference with the same bf16-input / f32-accumulate numerics.
    w0, b0, w1, b1, w2, b2 = params
    bf = lambda a: a.astype(jnp.bfloat16)
    h = jnp.dot(bf(x), bf(w0), preferred_element_type=jnp.float32) + b0
    h = jnp.maximum(h, 0.0)
    h = jnp.dot(bf(h), bf(w1), preferred_element_type=jnp.float32) + b1
    h = jnp.maximum(h, 0.0)
    return jnp.dot(bf(h), bf(w2), preferred_element_type=jnp.float32) + b2


if __name__ == "__main__":
    key = jax.random.PRNGKey(0)
    kx, kp = jax.random.split(key)
    params = init_params(kp)

    # Small primary case (B=8), a B%4!=0 case, a ragged-last-input-block case,
    # and multi-step-grid cases (forced small tiles) to exercise all paths.
    for B, max_tile_r in ((8, MAX_TILE_R), (20, MAX_TILE_R), (18, MAX_TILE_R),
                          (48, 8), (1024, 32)):
        x = jax.random.normal(kx, (B, NUM_FEATURES), dtype=jnp.float32)
        out = jax.block_until_ready(
            phasediff_forward(x, params, max_tile_r=max_tile_r))
        ref = reference_forward(x, params)
        assert out.shape == (B, OUT), (out.shape, B)
        assert jnp.allclose(out, ref, atol=2e-3, rtol=2e-3), (
            B, max_tile_r, float(jnp.max(jnp.abs(out - ref))))

    print("KERNEL_OK")
</pallas_src>

<mosaic_0001>
module attributes {stable_mosaic.version = 11 : i64} {
  func.func @phasediff_mlp_kernel(%arg0: i32, %arg1: memref<8x128xf32, #tpu.memory_space<vmem>>, %arg2: memref<128x128xbf16, #tpu.memory_space<vmem>>, %arg3: memref<1x128xf32, #tpu.memory_space<vmem>>, %arg4: memref<128x64xbf16, #tpu.memory_space<vmem>>, %arg5: memref<1x64xf32, #tpu.memory_space<vmem>>, %arg6: memref<64x12xbf16, #tpu.memory_space<vmem>>, %arg7: memref<1x12xf32, #tpu.memory_space<vmem>>, %arg8: memref<8x12xf32, #tpu.memory_space<vmem>>) attributes {dimension_semantics = [#tpu.dimension_semantics<parallel>], iteration_bounds = array<i64: 1>, scalar_prefetch = 0 : i64, scratch_operands = 0 : i64, tpu.core_type = #tpu.core_type<tc>, window_params = [{transform_indices = @transform_0, window_bounds = array<i64: 8, 128>}, {pipeline_mode = #tpu.pipeline_mode<synchronous>, transform_indices = @transform_1, window_bounds = array<i64: 128, 128>}, {pipeline_mode = #tpu.pipeline_mode<synchronous>, transform_indices = @transform_2, window_bounds = array<i64: 1, 128>}, {pipeline_mode = #tpu.pipeline_mode<synchronous>, transform_indices = @transform_3, window_bounds = array<i64: 128, 64>}, {pipeline_mode = #tpu.pipeline_mode<synchronous>, transform_indices = @transform_4, window_bounds = array<i64: 1, 64>}, {pipeline_mode = #tpu.pipeline_mode<synchronous>, transform_indices = @transform_5, window_bounds = array<i64: 64, 12>}, {pipeline_mode = #tpu.pipeline_mode<synchronous>, transform_indices = @transform_6, window_bounds = array<i64: 1, 12>}, {transform_indices = @transform_7, window_bounds = array<i64: 8, 12>}]} {
    %c0 = arith.constant 0 : index
    %c0_0 = arith.constant 0 : index
    %0 = vector.load %arg1[%c0, %c0_0] : memref<8x128xf32, #tpu.memory_space<vmem>>, vector<8x128xf32>
    %1 = arith.truncf %0 : vector<8x128xf32> to vector<8x128xbf16>
    %c0_1 = arith.constant 0 : index
    %c0_2 = arith.constant 0 : index
    %2 = vector.load %arg2[%c0_1, %c0_2] : memref<128x128xbf16, #tpu.memory_space<vmem>>, vector<128x128xbf16>
    %cst = arith.constant dense<0.000000e+00> : vector<8x128xf32>
    %3 = tpu.matmul %1, %2, %cst {dimension_numbers = #tpu.dot_dimension_numbers<[1], [0], [0], [1], [0, 0, 1, 1], [], []>} : vector<8x128xbf16>, vector<128x128xbf16>, vector<8x128xf32> -> vector<8x128xf32>
    %c0_3 = arith.constant 0 : index
    %c0_4 = arith.constant 0 : index
    %4 = vector.load %arg3[%c0_3, %c0_4] : memref<1x128xf32, #tpu.memory_space<vmem>>, vector<1x128xf32>
    %5 = vector.broadcast %4 : vector<1x128xf32> to vector<8x128xf32>
    %6 = arith.addf %3, %5 : vector<8x128xf32>
    %cst_5 = arith.constant 0.000000e+00 : f32
    %7 = vector.broadcast %cst_5 : f32 to vector<8x128xf32>
    %8 = arith.maximumf %6, %7 : vector<8x128xf32>
    %9 = arith.truncf %8 : vector<8x128xf32> to vector<8x128xbf16>
    %c0_6 = arith.constant 0 : index
    %c0_7 = arith.constant 0 : index
    %10 = vector.load %arg4[%c0_6, %c0_7] : memref<128x64xbf16, #tpu.memory_space<vmem>>, vector<128x64xbf16>
    %cst_8 = arith.constant dense<0.000000e+00> : vector<8x64xf32>
    %11 = tpu.matmul %9, %10, %cst_8 {dimension_numbers = #tpu.dot_dimension_numbers<[1], [0], [0], [1], [0, 0, 1, 1], [], []>} : vector<8x128xbf16>, vector<128x64xbf16>, vector<8x64xf32> -> vector<8x64xf32>
    %c0_9 = arith.constant 0 : index
    %c0_10 = arith.constant 0 : index
    %12 = vector.load %arg5[%c0_9, %c0_10] : memref<1x64xf32, #tpu.memory_space<vmem>>, vector<1x64xf32>
    %13 = vector.broadcast %12 : vector<1x64xf32> to vector<8x64xf32>
    %14 = arith.addf %11, %13 : vector<8x64xf32>
    %cst_11 = arith.constant 0.000000e+00 : f32
    %15 = vector.broadcast %cst_11 : f32 to vector<8x64xf32>
    %16 = arith.maximumf %14, %15 : vector<8x64xf32>
    %17 = arith.truncf %16 : vector<8x64xf32> to vector<8x64xbf16>
    %c0_12 = arith.constant 0 : index
    %c0_13 = arith.constant 0 : index
    %18 = vector.load %arg6[%c0_12, %c0_13] : memref<64x12xbf16, #tpu.memory_space<vmem>>, vector<64x12xbf16>
    %cst_14 = arith.constant dense<0.000000e+00> : vector<8x12xf32>
    %19 = tpu.matmul %17, %18, %cst_14 {dimension_numbers = #tpu.dot_dimension_numbers<[1], [0], [0], [1], [0, 0, 1, 1], [], []>} : vector<8x64xbf16>, vector<64x12xbf16>, vector<8x12xf32> -> vector<8x12xf32>
    %c0_15 = arith.constant 0 : index
    %c0_16 = arith.constant 0 : index
    %20 = vector.load %arg7[%c0_15, %c0_16] : memref<1x12xf32, #tpu.memory_space<vmem>>, vector<1x12xf32>
    %21 = vector.broadcast %20 : vector<1x12xf32> to vector<8x12xf32>
    %22 = arith.addf %19, %21 : vector<8x12xf32>
    %c0_17 = arith.constant 0 : index
    %c0_18 = arith.constant 0 : index
    %23 = vector.load %arg8[%c0_17, %c0_18] : memref<8x12xf32, #tpu.memory_space<vmem>>, vector<8x12xf32>
    tpu.vector_store %arg8[%c0_17, %c0_18], %22 {strides = array<i32>} : memref<8x12xf32, #tpu.memory_space<vmem>>, vector<8x12xf32>,
    return
  }
  func.func @transform_0(%arg0: i32) -> (i32, i32) {
    %c0_i32 = arith.constant 0 : i32
    %c0_i32_0 = arith.constant 0 : i32
    return %arg0, %c0_i32 : i32, i32
  }
  func.func @transform_1(%arg0: i32) -> (i32, i32) {
    %c0_i32 = arith.constant 0 : i32
    %c0_i32_0 = arith.constant 0 : i32
    %c0_i32_1 = arith.constant 0 : i32
    return %c0_i32, %c0_i32_0 : i32, i32
  }
  func.func @transform_2(%arg0: i32) -> (i32, i32) {
    %c0_i32 = arith.constant 0 : i32
    %c0_i32_0 = arith.constant 0 : i32
    %c0_i32_1 = arith.constant 0 : i32
    return %c0_i32, %c0_i32_0 : i32, i32
  }
  func.func @transform_3(%arg0: i32) -> (i32, i32) {
    %c0_i32 = arith.constant 0 : i32
    %c0_i32_0 = arith.constant 0 : i32
    %c0_i32_1 = arith.constant 0 : i32
    return %c0_i32, %c0_i32_0 : i32, i32
  }
  func.func @transform_4(%arg0: i32) -> (i32, i32) {
    %c0_i32 = arith.constant 0 : i32
    %c0_i32_0 = arith.constant 0 : i32
    %c0_i32_1 = arith.constant 0 : i32
    return %c0_i32, %c0_i32_0 : i32, i32
  }
  func.func @transform_5(%arg0: i32) -> (i32, i32) {
    %c0_i32 = arith.constant 0 : i32
    %c0_i32_0 = arith.constant 0 : i32
    %c0_i32_1 = arith.constant 0 : i32
    return %c0_i32, %c0_i32_0 : i32, i32
  }
  func.func @transform_6(%arg0: i32) -> (i32, i32) {
    %c0_i32 = arith.constant 0 : i32
    %c0_i32_0 = arith.constant 0 : i32
    %c0_i32_1 = arith.constant 0 : i32
    return %c0_i32, %c0_i32_0 : i32, i32
  }
  func.func @transform_7(%arg0: i32) -> (i32, i32) {
    %c0_i32 = arith.constant 0 : i32
    %c0_i32_0 = arith.constant 0 : i32
    return %arg0, %c0_i32 : i32, i32
  }
}

</mosaic_0001>

<llo_original>
// kernel: tpu_custom_call.1
$region0: #{tpu_custom_call.1}
  #allocation0 [shape = 'u32[]', space=smem, size = 0x4, offset = 0x4, fixed_abs, tag = 'smem constant byte address 0x4 - core index']
  #allocation1 [shape = 'u32[144,128]{1,0:T(1,128)}', space=vmem, size = 0x12000, scoped, tag = 'internal scratch']
  %s0 = inlined_call_operand.vmem [shape: f32[8,128], index: 0, kind: input, shape index: {}]
  %s1 = inlined_call_operand.vmem [shape: bf16[128,128], index: 1, kind: input, shape index: {}]
  %s2 = inlined_call_operand.vmem [shape: f32[1,128], index: 2, kind: input, shape index: {}]
  %s3 = inlined_call_operand.vmem [shape: bf16[128,64], index: 3, kind: input, shape index: {}]
  %s4 = inlined_call_operand.vmem [shape: f32[1,64], index: 4, kind: input, shape index: {}]
  %s5 = inlined_call_operand.vmem [shape: bf16[64,12], index: 5, kind: input, shape index: {}]
  %s6 = inlined_call_operand.vmem [shape: f32[1,12], index: 6, kind: input, shape index: {}]
  %s7 = inlined_call_operand.hbm [shape: f32[8,12], index: 7, kind: output, shape index: {}]
  %s8 = sld [smem:[#allocation0]]
  $region38: #{tpu_custom_call.1} parent=0
    _
  %s10 = ssub.s32 1, %s8
  %s11 = scalar_select 0, %s10, %s8
  $region1: #{tpu_custom_call.1} parent=0
    #allocation2 [shape = 'u8[4096]{0}', space=vmem, size = 0x1000, scoped, tag = 'output window, operand 0, single buffered']
    #allocation3 [shape = 's32[1]{0}', space=sflag, size = 0x4, scoped, tag = 'scoped memory for tpu_custom_call.1']
    %12 = vsyncpa [#allocation3], 0
    // Predicated region
    $region2: #{tpu_custom_call.1} parent=1 // pred_check
      _
    $region3: #{tpu_custom_call.1} parent=1 // pred_check_branch
      %14 = sbr.rel (0) target = $region5
    $region4: #{tpu_custom_call.1} parent=1 // pred_region
      _
    $region5: #{tpu_custom_call.1} parent=1 // pred_fallthru
      _
    // Predicated region
    $region6: #{tpu_custom_call.1} parent=1 // pred_check
      _
    $region7: #{tpu_custom_call.1} parent=1 // pred_check_branch
      %16 = sbr.rel (0) target = $region9
    $region8: #{tpu_custom_call.1} parent=1 // pred_region
      _
    $region9: #{tpu_custom_call.1} parent=1 // pred_fallthru
      _
    // Predicated region
    $region10: #{tpu_custom_call.1} parent=1 // pred_check
      _
    $region11: #{tpu_custom_call.1} parent=1 // pred_check_branch
      %18 = sbr.rel (0) target = $region13
    $region12: #{tpu_custom_call.1} parent=1 // pred_region
      _
    $region13: #{tpu_custom_call.1} parent=1 // pred_fallthru
      _
    // Predicated region
    $region14: #{tpu_custom_call.1} parent=1 // pred_check
      _
    $region15: #{tpu_custom_call.1} parent=1 // pred_check_branch
      %20 = sbr.rel (0) target = $region17
    $region16: #{tpu_custom_call.1} parent=1 // pred_region
      _
    $region17: #{tpu_custom_call.1} parent=1 // pred_fallthru
      _
    // Predicated region
    $region18: #{tpu_custom_call.1} parent=1 // pred_check
      _
    $region19: #{tpu_custom_call.1} parent=1 // pred_check_branch
      %22 = sbr.rel (0) target = $region21
    $region20: #{tpu_custom_call.1} parent=1 // pred_region
      _
    $region21: #{tpu_custom_call.1} parent=1 // pred_fallthru
      _
    // Predicated region
    $region22: #{tpu_custom_call.1} parent=1 // pred_check
      _
    $region23: #{tpu_custom_call.1} parent=1 // pred_check_branch
      %24 = sbr.rel (0) target = $region25
    $region24: #{tpu_custom_call.1} parent=1 // pred_region
      _
    $region25: #{tpu_custom_call.1} parent=1 // pred_fallthru
      _
    // Predicated region
    $region26: #{tpu_custom_call.1} parent=1 // pred_check
      _
    $region27: #{tpu_custom_call.1} parent=1 // pred_check_branch
      %26 = sbr.rel (0) target = $region29
    $region28: #{tpu_custom_call.1} parent=1 // pred_region
      _
    $region29: #{tpu_custom_call.1} parent=1 // pred_fallthru
      _
    %v28 = vld [vmem:[%s0] sm:$0xff]
    %v29 = vpack.c.bf16 %v28, %v28
    %v30 = vld [vmem:[%s1] sm:$0xf]
    %v31 = vld [vmem:[%s1 + $0x4] sm:$0xf]
    %v32 = vld [vmem:[%s1 + $0x8] sm:$0xf]
    %v33 = vld [vmem:[%s1 + $0xc] sm:$0xf]
    %v34 = vld [vmem:[%s1 + $0x10] sm:$0xf]
    %v35 = vld [vmem:[%s1 + $0x14] sm:$0xf]
    %v36 = vld [vmem:[%s1 + $0x18] sm:$0xf]
    %v37 = vld [vmem:[%s1 + $0x1c] sm:$0xf]
    %v38 = vld [vmem:[%s1 + $0x20] sm:$0xf]
    %v39 = vld [vmem:[%s1 + $0x24] sm:$0xf]
    %v40 = vld [vmem:[%s1 + $0x28] sm:$0xf]
    %v41 = vld [vmem:[%s1 + $0x2c] sm:$0xf]
    %v42 = vld [vmem:[%s1 + $0x30] sm:$0xf]
    %v43 = vld [vmem:[%s1 + $0x34] sm:$0xf]
    %v44 = vld [vmem:[%s1 + $0x38] sm:$0xf]
    %v45 = vld [vmem:[%s1 + $0x3c] sm:$0xf]
    %v46 = vld [vmem:[%s2] sm:$0x1]
    %v48 = vlaneseq
    %v49 = vshrl.u32 %v48, 7
    %v50 = vsub.s32 0, %v49
    %v51 = vrot.slane %v46, %v50
    %v69 = vunpack.c.l.b16 %v30
    %v70 = vunpack.c.l.b16 %v31
    %v71 = vunpack.c.l.b16 %v32
    %v72 = vunpack.c.l.b16 %v33
    %v73 = vunpack.c.l.b16 %v34
    %v74 = vunpack.c.l.b16 %v35
    %v75 = vunpack.c.l.b16 %v36
    %v76 = vunpack.c.l.b16 %v37
    %v77 = vunpack.c.l.b16 %v38
    %v78 = vunpack.c.l.b16 %v39
    %v79 = vunpack.c.l.b16 %v40
    %v80 = vunpack.c.l.b16 %v41
    %v81 = vunpack.c.l.b16 %v42
    %v82 = vunpack.c.l.b16 %v43
    %v83 = vunpack.c.l.b16 %v44
    %v84 = vunpack.c.l.b16 %v45
    %v85 = vpack.c.b16 %v70, %v69
    %v86 = vpack.c.b16 %v72, %v71
    %v87 = vpack.c.b16 %v74, %v73
    %v88 = vpack.c.b16 %v76, %v75
    %v89 = vpack.c.b16 %v78, %v77
    %v90 = vpack.c.b16 %v80, %v79
    %v91 = vpack.c.b16 %v82, %v81
    %v92 = vpack.c.b16 %v84, %v83
    %101 = vmatprep.subr.bf16.mxu0 0
    %102 = vmatpush1.bf16.msra.mxu0 %v85
    %103 = vmatprep.subr.bf16.mxu0 0
    %104 = vmatpush1.bf16.msra.mxu0 %v86
    %105 = vmatprep.subr.bf16.mxu0 0
    %106 = vmatpush1.bf16.msra.mxu0 %v87
    %107 = vmatprep.subr.bf16.mxu0 0
    %108 = vmatpush1.bf16.msra.mxu0 %v88
    %109 = vmatprep.subr.bf16.mxu0 0
    %110 = vmatpush1.bf16.msra.mxu0 %v89
    %111 = vmatprep.subr.bf16.mxu0 0
    %112 = vmatpush1.bf16.msra.mxu0 %v90
    %113 = vmatprep.subr.bf16.mxu0 0
    %114 = vmatpush1.bf16.msra.mxu0 %v91
    %115 = vmatprep.subr.bf16.mxu0 0
    %116 = vmatpush1.bf16.msra.mxu0 %v92
    %117 = vmatprep.subr.bf16.mxu0 0
    %118 = vmatpush1.bf16.msra.mxu0 0
    %119 = vmatprep.subr.bf16.mxu0 0
    %120 = vmatpush1.bf16.msra.mxu0 0
    %121 = vmatprep.subr.bf16.mxu0 0
    %122 = vmatpush1.bf16.msra.mxu0 0
    %123 = vmatprep.subr.bf16.mxu0 0
    %124 = vmatpush1.bf16.msra.mxu0 0
    %125 = vmatprep.subr.bf16.mxu0 0
    %126 = vmatpush1.bf16.msra.mxu0 0
    %127 = vmatprep.subr.bf16.mxu0 0
    %128 = vmatpush1.bf16.msra.mxu0 0
    %129 = vmatprep.subr.bf16.mxu0 0
    %130 = vmatpush1.bf16.msra.mxu0 0
    %131 = vmatprep.subr.bf16.mxu0 0
    %132 = vmatpush1.bf16.msra.mxu0 0
    %133 = vmatprep.mubr.bf16.mxu0 0
    %134 = vmatmul.mubr.bf16.gmra.mrb[0].mxu0 %v29
    %v135 = vpop.f32.mrb[0].mxu0
    %v136 = vadd.f32 %v51, %v135
    %v137 = vpop.f32.mrb[0].mxu0
    %v138 = vpop.f32.mrb[0].mxu0
    %v139 = vpop.f32.mrb[0].mxu0
    %140 = vdwg.mxu0
    %v141 = vmax.f32 %v136, 0.0
    %v142 = vpack.c.bf16 %v141, %v141
    %v143 = vld [vmem:[%s3] sm:$0xf]
    %v144 = vld [vmem:[%s3 + $0x4] sm:$0xf]
    %v145 = vld [vmem:[%s3 + $0x8] sm:$0xf]
    %v146 = vld [vmem:[%s3 + $0xc] sm:$0xf]
    %v147 = vld [vmem:[%s3 + $0x10] sm:$0xf]
    %v148 = vld [vmem:[%s3 + $0x14] sm:$0xf]
    %v149 = vld [vmem:[%s3 + $0x18] sm:$0xf]
    %v150 = vld [vmem:[%s3 + $0x1c] sm:$0xf]
    %v151 = vld [vmem:[%s3 + $0x20] sm:$0xf]
    %v152 = vld [vmem:[%s3 + $0x24] sm:$0xf]
    %v153 = vld [vmem:[%s3 + $0x28] sm:$0xf]
    %v154 = vld [vmem:[%s3 + $0x2c] sm:$0xf]
    %v155 = vld [vmem:[%s3 + $0x30] sm:$0xf]
    %v156 = vld [vmem:[%s3 + $0x34] sm:$0xf]
    %v157 = vld [vmem:[%s3 + $0x38] sm:$0xf]
    %v158 = vld [vmem:[%s3 + $0x3c] sm:$0xf]
    %v159 = vld [vmem:[%s4] sm:$0x1]
    %v161 = vlaneseq
    %v162 = vshrl.u32 %v161, 7
    %v163 = vsub.s32 0, %v162
    %v164 = vrot.slane %v159, %v163
    %v182 = vunpack.c.l.b16 %v143
    %v183 = vunpack.c.l.b16 %v144
    %v184 = vunpack.c.l.b16 %v145
    %v185 = vunpack.c.l.b16 %v146
    %v186 = vunpack.c.l.b16 %v147
    %v187 = vunpack.c.l.b16 %v148
    %v188 = vunpack.c.l.b16 %v149
    %v189 = vunpack.c.l.b16 %v150
    %v190 = vunpack.c.l.b16 %v151
    %v191 = vunpack.c.l.b16 %v152
    %v192 = vunpack.c.l.b16 %v153
    %v193 = vunpack.c.l.b16 %v154
    %v194 = vunpack.c.l.b16 %v155
    %v195 = vunpack.c.l.b16 %v156
    %v196 = vunpack.c.l.b16 %v157
    %v197 = vunpack.c.l.b16 %v158
    %v198 = vpack.c.b16 %v183, %v182
    %v199 = vpack.c.b16 %v185, %v184
    %v200 = vpack.c.b16 %v187, %v186
    %v201 = vpack.c.b16 %v189, %v188
    %v202 = vpack.c.b16 %v191, %v190
    %v203 = vpack.c.b16 %v193, %v192
    %v204 = vpack.c.b16 %v195, %v194
    %v205 = vpack.c.b16 %v197, %v196
    %214 = vmatprep.subr.bf16.mxu0 0
    %215 = vmatpush1.bf16.msra.mxu0 %v198
    %216 = vmatprep.subr.bf16.mxu0 0
    %217 = vmatpush1.bf16.msra.mxu0 %v199
    %218 = vmatprep.subr.bf16.mxu0 0
    %219 = vmatpush1.bf16.msra.mxu0 %v200
    %220 = vmatprep.subr.bf16.mxu0 0
    %221 = vmatpush1.bf16.msra.mxu0 %v201
    %222 = vmatprep.subr.bf16.mxu0 0
    %223 = vmatpush1.bf16.msra.mxu0 %v202
    %224 = vmatprep.subr.bf16.mxu0 0
    %225 = vmatpush1.bf16.msra.mxu0 %v203
    %226 = vmatprep.subr.bf16.mxu0 0
    %227 = vmatpush1.bf16.msra.mxu0 %v204
    %228 = vmatprep.subr.bf16.mxu0 0
    %229 = vmatpush1.bf16.msra.mxu0 %v205
    %230 = vmatprep.subr.bf16.mxu0 0
    %231 = vmatpush1.bf16.msra.mxu0 0
    %232 = vmatprep.subr.bf16.mxu0 0
    %233 = vmatpush1.bf16.msra.mxu0 0
    %234 = vmatprep.subr.bf16.mxu0 0
    %235 = vmatpush1.bf16.msra.mxu0 0
    %236 = vmatprep.subr.bf16.mxu0 0
    %237 = vmatpush1.bf16.msra.mxu0 0
    %238 = vmatprep.subr.bf16.mxu0 0
    %239 = vmatpush1.bf16.msra.mxu0 0
    %240 = vmatprep.subr.bf16.mxu0 0
    %241 = vmatpush1.bf16.msra.mxu0 0
    %242 = vmatprep.subr.bf16.mxu0 0
    %243 = vmatpush1.bf16.msra.mxu0 0
    %244 = vmatprep.subr.bf16.mxu0 0
    %245 = vmatpush1.bf16.msra.mxu0 0
    %246 = vmatprep.mubr.bf16.mxu0 0
    %247 = vmatmul.mubr.bf16.gmra.mrb[0].mxu0 %v142
    %v248 = vpop.f32.mrb[0].mxu0
    %v249 = vadd.f32 %v164, %v248
    %v250 = vpop.f32.mrb[0].mxu0
    %v251 = vpop.f32.mrb[0].mxu0
    %v252 = vpop.f32.mrb[0].mxu0
    %253 = vdwg.mxu0
    %v254 = vmax.f32 %v249, 0.0
    %v255 = vpack.c.bf16 %v254, %v254
    %v256 = vld [vmem:[%s5] sm:$0xf]
    %v257 = vld [vmem:[%s5 + $0x4] sm:$0xf]
    %v258 = vld [vmem:[%s5 + $0x8] sm:$0xf]
    %v259 = vld [vmem:[%s5 + $0xc] sm:$0xf]
    %v260 = vld [vmem:[%s5 + $0x10] sm:$0xf]
    %v261 = vld [vmem:[%s5 + $0x14] sm:$0xf]
    %v262 = vld [vmem:[%s5 + $0x18] sm:$0xf]
    %v263 = vld [vmem:[%s5 + $0x1c] sm:$0xf]
    %v264 = vld [vmem:[%s6] sm:$0x1]
    %v266 = vlaneseq
    %v267 = vshrl.u32 %v266, 7
    %v268 = vsub.s32 0, %v267
    %v269 = vrot.slane %v264, %v268
    %v279 = vunpack.c.l.b16 %v256
    %v280 = vunpack.c.l.b16 %v257
    %v281 = vunpack.c.l.b16 %v258
    %v282 = vunpack.c.l.b16 %v259
    %v283 = vunpack.c.l.b16 %v260
    %v284 = vunpack.c.l.b16 %v261
    %v285 = vunpack.c.l.b16 %v262
    %v286 = vunpack.c.l.b16 %v263
    %v287 = vpack.c.b16 %v280, %v279
    %v288 = vpack.c.b16 %v282, %v281
    %v289 = vpack.c.b16 %v284, %v283
    %v290 = vpack.c.b16 %v286, %v285
    %vm295 = vcmask 523264
    %v297 = vsel %vm295, %v255, 0
    %299 = vmatprep.subr.bf16.mxu0 0
    %300 = vmatpush1.bf16.msra.mxu0 %v287
    %301 = vmatprep.subr.bf16.mxu0 0
    %302 = vmatpush1.bf16.msra.mxu0 %v288
    %303 = vmatprep.subr.bf16.mxu0 0
    %304 = vmatpush1.bf16.msra.mxu0 %v289
    %305 = vmatprep.subr.bf16.mxu0 0
    %306 = vmatpush1.bf16.msra.mxu0 %v290
    %307 = vmatprep.subr.bf16.mxu0 0
    %308 = vmatpush1.bf16.msra.mxu0 0
    %309 = vmatprep.subr.bf16.mxu0 0
    %310 = vmatpush1.bf16.msra.mxu0 0
    %311 = vmatprep.subr.bf16.mxu0 0
    %312 = vmatpush1.bf16.msra.mxu0 0
    %313 = vmatprep.subr.bf16.mxu0 0
    %314 = vmatpush1.bf16.msra.mxu0 0
    %315 = vmatprep.subr.bf16.mxu0 0
    %316 = vmatpush1.bf16.msra.mxu0 0
    %317 = vmatprep.subr.bf16.mxu0 0
    %318 = vmatpush1.bf16.msra.mxu0 0
    %319 = vmatprep.subr.bf16.mxu0 0
    %320 = vmatpush1.bf16.msra.mxu0 0
    %321 = vmatprep.subr.bf16.mxu0 0
    %322 = vmatpush1.bf16.msra.mxu0 0
    %323 = vmatprep.subr.bf16.mxu0 0
    %324 = vmatpush1.bf16.msra.mxu0 0
    %325 = vmatprep.subr.bf16.mxu0 0
    %326 = vmatpush1.bf16.msra.mxu0 0
    %327 = vmatprep.subr.bf16.mxu0 0
    %328 = vmatpush1.bf16.msra.mxu0 0
    %329 = vmatprep.subr.bf16.mxu0 0
    %330 = vmatpush1.bf16.msra.mxu0 0
    %331 = vmatprep.mubr.bf16.mxu0 0
    %332 = vmatmul.mubr.bf16.gmra.mrb[0].mxu0 %v297
    %v333 = vpop.f32.mrb[0].mxu0
    %v334 = vadd.f32 %v269, %v333
    %v335 = vpop.f32.mrb[0].mxu0
    %v336 = vpop.f32.mrb[0].mxu0
    %v337 = vpop.f32.mrb[0].mxu0
    %338 = vdwg.mxu0
    %vm339 = vcmask 97280
    %340 = vst.msk [vmem:[#allocation2] sm:$0xff] %vm339, %v334
    // Predicated region
    $region30: #{tpu_custom_call.1} parent=1 // pred_check
      _
    $region31: #{tpu_custom_call.1} parent=1 // pred_check_branch
      %342 = sbr.rel (0) target = $region33
    $region32: #{tpu_custom_call.1} parent=1 // pred_region
      %s344 = ssub.s32 128, 128
      %345 = vsyncadd [#allocation3], %s344
      %s347 = sshll.u32 [#allocation2], 4
      %s348 = int_to_ptr.vmem [resolvable:$true] %s347
      %350 = dma.vmem_to_hbm [thread:$0]  %s348, 128, %s7, [#allocation3]
    $region33: #{tpu_custom_call.1} parent=1 // pred_fallthru
      _
    // Predicated region
    $region34: #{tpu_custom_call.1} parent=1 // pred_check
      _
    $region35: #{tpu_custom_call.1} parent=1 // pred_check_branch
      %352 = sbr.rel (0) target = $region37
    $region36: #{tpu_custom_call.1} parent=1 // pred_region
      %353 = dma.done [#allocation3], 128
    $region37: #{tpu_custom_call.1} parent=1 // pred_fallthru
      _
    %354 = vsyncpa [#allocation3], 1

</llo_original>
